<compile_context>
chip_gen: v5e
topology: v5e:2x2
jax: 0.10.0
libtpu: 0.0.40
codegen_flags: <defaults>
</compile_context>

<pallas_src>
import jax
import jax.numpy as jnp
from jax.experimental import pallas as pl
from jax.experimental.pallas import tpu as pltpu


def _round_up(x, m):
    return (x + m - 1) // m * m


def _make_kernel(dim: int, inv_binsize: float):
    dim2 = dim * dim

    def kernel(lut_ref, x_ref, o_ref):
        # lut_ref : (3, dim, dim*dim)   resident in VMEM, [c, b, g*dim + r]
        # x_ref   : (1, 3, Pt)          r/g/b rows for Pt pixels (lane axis)
        # o_ref   : (1, 3, Pt)
        x = x_ref[0]                                       # (3, Pt) f32
        pt = x.shape[-1]

        scaled = x * inv_binsize                           # (3, Pt)
        idx_f = jnp.clip(jnp.floor(scaled), 0.0, float(dim - 2))
        frac = scaled - idx_f                              # (3, Pt)
        idx = idx_f.astype(jnp.int32)                      # (3, Pt)

        r_id, g_id, b_id = idx[0:1], idx[1:2], idx[2:3]    # (1, Pt) int32
        r_d, g_d, b_d = frac[0:1], frac[1:2], frac[2:3]    # (1, Pt) f32

        # Combined (g, r) interpolation weights: Wgr[g*dim + r, p] (4-hot).
        k_iota = jax.lax.broadcasted_iota(jnp.int32, (dim2, pt), 0)
        gr = g_id * dim + r_id                             # (1, Pt)
        w_gr = (jnp.where(k_iota == gr,            (1.0 - g_d) * (1.0 - r_d), 0.0)
                + jnp.where(k_iota == gr + 1,        (1.0 - g_d) * r_d,         0.0)
                + jnp.where(k_iota == gr + dim,      g_d * (1.0 - r_d),         0.0)
                + jnp.where(k_iota == gr + dim + 1,  g_d * r_d,                 0.0))

        # b-axis interpolation weights: Wb[b, p] (2-hot).
        b_iota = jax.lax.broadcasted_iota(jnp.int32, (dim, pt), 0)
        w_b = (jnp.where(b_iota == b_id, 1.0 - b_d, 0.0)
               + jnp.where(b_iota == b_id + 1, b_d, 0.0))

        # Per output channel: MXU contraction over (g, r), then reduce over b.
        rows = []
        for c in range(3):
            t = jnp.dot(lut_ref[c], w_gr,                  # (dim, Pt)
                        preferred_element_type=jnp.float32)
            rows.append(jnp.sum(w_b * t, axis=0, keepdims=True))    # (1, Pt)
        o_ref[0] = jnp.concatenate(rows, axis=0).astype(o_ref.dtype)

    return kernel


def _pixel_tile(P: int, dim: int) -> int:
    # Keep the (dim^2, Pt) f32 weight intermediate around ~2 MiB.
    budget = max(128, (2 * 1024 * 1024) // (4 * dim * dim))
    pt = max(128, min(2048, (budget // 128) * 128))
    return min(pt, _round_up(P, 128))


@jax.jit
def trilinear_forward(lut, x):
    """Pallas forward of TrilinearInterpolation. Returns (lut, output)."""
    N, C, W, H = x.shape
    assert C == 3 and lut.shape[0] == 3 and lut.shape[1] == lut.shape[-1]
    dim = lut.shape[-1]
    binsize = 1.000001 / (dim - 1)

    P = W * H
    Pt = _pixel_tile(P, dim)
    P_pad = _round_up(P, Pt)

    xf = x.reshape(N, 3, P).astype(jnp.float32)
    if P_pad != P:
        xf = jnp.pad(xf, ((0, 0), (0, 0), (0, P_pad - P)))

    # Flat LUT per channel: [c, b, g*dim + r]  (matches id = r + g*dim + b*dim^2)
    lut2 = lut.astype(jnp.float32).reshape(3, dim, dim * dim)

    out = pl.pallas_call(
        _make_kernel(dim, 1.0 / binsize),
        out_shape=jax.ShapeDtypeStruct((N, 3, P_pad), jnp.float32),
        grid_spec=pltpu.PrefetchScalarGridSpec(
            num_scalar_prefetch=0,
            grid=(N, P_pad // Pt),
            in_specs=[
                pl.BlockSpec((3, dim, dim * dim), lambda n, t: (0, 0, 0)),
                pl.BlockSpec((1, 3, Pt), lambda n, t: (n, 0, t)),
            ],
            out_specs=pl.BlockSpec((1, 3, Pt), lambda n, t: (n, 0, t)),
        ),
        compiler_params=pltpu.CompilerParams(
            dimension_semantics=("parallel", "parallel")),
    )(lut2, xf)

    out = out[:, :, :P].reshape(N, 3, W, H).astype(x.dtype)
    return lut, out


def trilinear_reference(lut, x):
    """Plain-JAX gather-based reference (same math as the CUDA op)."""
    dim = lut.shape[-1]
    inv = 1.0 / (1.000001 / (dim - 1))
    r, g, b = x[:, 0], x[:, 1], x[:, 2]

    def split(v):
        s = v * inv
        i = jnp.clip(jnp.floor(s), 0.0, float(dim - 2))
        return i.astype(jnp.int32), s - i

    rid, rd = split(r)
    gid, gd = split(g)
    bid, bd = split(b)

    chans = []
    for c in range(3):
        lc = lut[c]                                     # (dim, dim, dim) [b,g,r]

        def corner(db, dg, dr, lc=lc):
            return lc[bid + db, gid + dg, rid + dr]

        o = ((1 - rd) * (1 - gd) * (1 - bd) * corner(0, 0, 0)
             + rd * (1 - gd) * (1 - bd) * corner(0, 0, 1)
             + (1 - rd) * gd * (1 - bd) * corner(0, 1, 0)
             + rd * gd * (1 - bd) * corner(0, 1, 1)
             + (1 - rd) * (1 - gd) * bd * corner(1, 0, 0)
             + rd * (1 - gd) * bd * corner(1, 0, 1)
             + (1 - rd) * gd * bd * corner(1, 1, 0)
             + rd * gd * bd * corner(1, 1, 1))
        chans.append(o)
    return jnp.stack(chans, axis=1)


if __name__ == "__main__":
    key = jax.random.PRNGKey(0)
    k_lut, k_img = jax.random.split(key)
    dim = 9                                            # small 3D LUT lattice
    lut = jax.random.uniform(k_lut, (3, dim, dim, dim), jnp.float32)
    x = jax.random.uniform(k_img, (2, 3, 16, 16), jnp.float32)

    lut_out, y = trilinear_forward(lut, x)
    y = jax.block_until_ready(y)
    assert lut_out.shape == lut.shape and y.shape == x.shape, (lut_out.shape, y.shape)

    y_ref = trilinear_reference(lut, x)
    err = float(jnp.max(jnp.abs(y - y_ref)))
    assert err < 1e-2, f"max abs error vs reference: {err}"
    print("KERNEL_OK")
</pallas_src>

<mosaic_0001>
module attributes {stable_mosaic.version = 11 : i64} {
  func.func @kernel(%arg0: i32, %arg1: i32, %arg2: memref<3x9x81xf32, #tpu.memory_space<vmem>>, %arg3: memref<1x3x256xf32, #tpu.memory_space<vmem>>, %arg4: memref<1x3x256xf32, #tpu.memory_space<vmem>>) attributes {dimension_semantics = [#tpu.dimension_semantics<parallel>, #tpu.dimension_semantics<parallel>], iteration_bounds = array<i64: 2, 1>, scalar_prefetch = 0 : i64, scratch_operands = 0 : i64, tpu.core_type = #tpu.core_type<tc>, window_params = [{pipeline_mode = #tpu.pipeline_mode<synchronous>, transform_indices = @transform_0, window_bounds = array<i64: 3, 9, 81>}, {transform_indices = @transform_1, window_bounds = array<i64: 1, 3, 256>}, {transform_indices = @transform_2, window_bounds = array<i64: 1, 3, 256>}]} {
    %c0 = arith.constant 0 : index
    %c0_0 = arith.constant 0 : index
    %c0_1 = arith.constant 0 : index
    %0 = vector.load %arg3[%c0, %c0_0, %c0_1] : memref<1x3x256xf32, #tpu.memory_space<vmem>>, vector<1x3x256xf32>
    %1 = vector.shape_cast %0 : vector<1x3x256xf32> to vector<3x256xf32>
    %cst = arith.constant 7.99999189 : f32
    %2 = vector.broadcast %cst : f32 to vector<3x256xf32>
    %3 = arith.mulf %1, %2 : vector<3x256xf32>
    %4 = math.floor %3 : vector<3x256xf32>
    %cst_2 = arith.constant 0.000000e+00 : f32
    %cst_3 = arith.constant 7.000000e+00 : f32
    %5 = vector.broadcast %cst_2 : f32 to vector<3x256xf32>
    %6 = arith.maximumf %5, %4 : vector<3x256xf32>
    %7 = vector.broadcast %cst_3 : f32 to vector<3x256xf32>
    %8 = arith.minimumf %7, %6 : vector<3x256xf32>
    %9 = arith.subf %3, %8 : vector<3x256xf32>
    %10 = arith.fptosi %8 : vector<3x256xf32> to vector<3x256xi32>
    %11 = vector.extract_strided_slice %10 {offsets = [0, 0], sizes = [1, 256], strides = [1, 1]} : vector<3x256xi32> to vector<1x256xi32>
    %12 = vector.extract_strided_slice %10 {offsets = [1, 0], sizes = [1, 256], strides = [1, 1]} : vector<3x256xi32> to vector<1x256xi32>
    %13 = vector.extract_strided_slice %10 {offsets = [2, 0], sizes = [1, 256], strides = [1, 1]} : vector<3x256xi32> to vector<1x256xi32>
    %14 = vector.extract_strided_slice %9 {offsets = [0, 0], sizes = [1, 256], strides = [1, 1]} : vector<3x256xf32> to vector<1x256xf32>
    %15 = vector.extract_strided_slice %9 {offsets = [1, 0], sizes = [1, 256], strides = [1, 1]} : vector<3x256xf32> to vector<1x256xf32>
    %16 = vector.extract_strided_slice %9 {offsets = [2, 0], sizes = [1, 256], strides = [1, 1]} : vector<3x256xf32> to vector<1x256xf32>
    %17 = tpu.iota {dimensions = array<i32: 0>} : vector<81x256xi32>
    %c9_i32 = arith.constant 9 : i32
    %18 = vector.broadcast %c9_i32 : i32 to vector<1x256xi32>
    %19 = arith.muli %12, %18 : vector<1x256xi32>
    %20 = arith.addi %19, %11 : vector<1x256xi32>
    %21 = vector.broadcast %20 : vector<1x256xi32> to vector<81x256xi32>
    %22 = arith.cmpi eq, %17, %21 : vector<81x256xi32>
    %cst_4 = arith.constant 1.000000e+00 : f32
    %23 = vector.broadcast %cst_4 : f32 to vector<1x256xf32>
    %24 = arith.subf %23, %15 : vector<1x256xf32>
    %cst_5 = arith.constant 1.000000e+00 : f32
    %25 = vector.broadcast %cst_5 : f32 to vector<1x256xf32>
    %26 = arith.subf %25, %14 : vector<1x256xf32>
    %27 = arith.mulf %24, %26 : vector<1x256xf32>
    %cst_6 = arith.constant 0.000000e+00 : f32
    %28 = vector.shape_cast %27 : vector<1x256xf32> to vector<1x256xf32>
    %29 = vector.broadcast %28 : vector<1x256xf32> to vector<81x256xf32>
    %30 = vector.broadcast %cst_6 : f32 to vector<81x256xf32>
    %31 = arith.select %22, %29, %30 : vector<81x256xi1>, vector<81x256xf32>
    %c1_i32 = arith.constant 1 : i32
    %32 = vector.broadcast %c1_i32 : i32 to vector<1x256xi32>
    %33 = arith.addi %20, %32 : vector<1x256xi32>
    %34 = vector.broadcast %33 : vector<1x256xi32> to vector<81x256xi32>
    %35 = arith.cmpi eq, %17, %34 : vector<81x256xi32>
    %cst_7 = arith.constant 1.000000e+00 : f32
    %36 = vector.broadcast %cst_7 : f32 to vector<1x256xf32>
    %37 = arith.subf %36, %15 : vector<1x256xf32>
    %38 = arith.mulf %37, %14 : vector<1x256xf32>
    %cst_8 = arith.constant 0.000000e+00 : f32
    %39 = vector.shape_cast %38 : vector<1x256xf32> to vector<1x256xf32>
    %40 = vector.broadcast %39 : vector<1x256xf32> to vector<81x256xf32>
    %41 = vector.broadcast %cst_8 : f32 to vector<81x256xf32>
    %42 = arith.select %35, %40, %41 : vector<81x256xi1>, vector<81x256xf32>
    %43 = arith.addf %31, %42 : vector<81x256xf32>
    %c9_i32_9 = arith.constant 9 : i32
    %44 = vector.broadcast %c9_i32_9 : i32 to vector<1x256xi32>
    %45 = arith.addi %20, %44 : vector<1x256xi32>
    %46 = vector.broadcast %45 : vector<1x256xi32> to vector<81x256xi32>
    %47 = arith.cmpi eq, %17, %46 : vector<81x256xi32>
    %cst_10 = arith.constant 1.000000e+00 : f32
    %48 = vector.broadcast %cst_10 : f32 to vector<1x256xf32>
    %49 = arith.subf %48, %14 : vector<1x256xf32>
    %50 = arith.mulf %15, %49 : vector<1x256xf32>
    %cst_11 = arith.constant 0.000000e+00 : f32
    %51 = vector.shape_cast %50 : vector<1x256xf32> to vector<1x256xf32>
    %52 = vector.broadcast %51 : vector<1x256xf32> to vector<81x256xf32>
    %53 = vector.broadcast %cst_11 : f32 to vector<81x256xf32>
    %54 = arith.select %47, %52, %53 : vector<81x256xi1>, vector<81x256xf32>
    %55 = arith.addf %43, %54 : vector<81x256xf32>
    %c9_i32_12 = arith.constant 9 : i32
    %56 = vector.broadcast %c9_i32_12 : i32 to vector<1x256xi32>
    %57 = arith.addi %20, %56 : vector<1x256xi32>
    %c1_i32_13 = arith.constant 1 : i32
    %58 = vector.broadcast %c1_i32_13 : i32 to vector<1x256xi32>
    %59 = arith.addi %57, %58 : vector<1x256xi32>
    %60 = vector.broadcast %59 : vector<1x256xi32> to vector<81x256xi32>
    %61 = arith.cmpi eq, %17, %60 : vector<81x256xi32>
    %62 = arith.mulf %15, %14 : vector<1x256xf32>
    %cst_14 = arith.constant 0.000000e+00 : f32
    %63 = vector.shape_cast %62 : vector<1x256xf32> to vector<1x256xf32>
    %64 = vector.broadcast %63 : vector<1x256xf32> to vector<81x256xf32>
    %65 = vector.broadcast %cst_14 : f32 to vector<81x256xf32>
    %66 = arith.select %61, %64, %65 : vector<81x256xi1>, vector<81x256xf32>
    %67 = arith.addf %55, %66 : vector<81x256xf32>
    %68 = tpu.iota {dimensions = array<i32: 0>} : vector<9x256xi32>
    %69 = vector.broadcast %13 : vector<1x256xi32> to vector<9x256xi32>
    %70 = arith.cmpi eq, %68, %69 : vector<9x256xi32>
    %cst_15 = arith.constant 1.000000e+00 : f32
    %71 = vector.broadcast %cst_15 : f32 to vector<1x256xf32>
    %72 = arith.subf %71, %16 : vector<1x256xf32>
    %cst_16 = arith.constant 0.000000e+00 : f32
    %73 = vector.shape_cast %72 : vector<1x256xf32> to vector<1x256xf32>
    %74 = vector.broadcast %73 : vector<1x256xf32> to vector<9x256xf32>
    %75 = vector.broadcast %cst_16 : f32 to vector<9x256xf32>
    %76 = arith.select %70, %74, %75 : vector<9x256xi1>, vector<9x256xf32>
    %c1_i32_17 = arith.constant 1 : i32
    %77 = vector.broadcast %c1_i32_17 : i32 to vector<1x256xi32>
    %78 = arith.addi %13, %77 : vector<1x256xi32>
    %79 = vector.broadcast %78 : vector<1x256xi32> to vector<9x256xi32>
    %80 = arith.cmpi eq, %68, %79 : vector<9x256xi32>
    %cst_18 = arith.constant 0.000000e+00 : f32
    %81 = vector.shape_cast %16 : vector<1x256xf32> to vector<1x256xf32>
    %82 = vector.broadcast %81 : vector<1x256xf32> to vector<9x256xf32>
    %83 = vector.broadcast %cst_18 : f32 to vector<9x256xf32>
    %84 = arith.select %80, %82, %83 : vector<9x256xi1>, vector<9x256xf32>
    %85 = arith.addf %76, %84 : vector<9x256xf32>
    %c0_19 = arith.constant 0 : index
    %c0_20 = arith.constant 0 : index
    %c0_21 = arith.constant 0 : index
    %86 = vector.load %arg2[%c0_19, %c0_20, %c0_21] : memref<3x9x81xf32, #tpu.memory_space<vmem>>, vector<1x9x81xf32>
    %87 = vector.shape_cast %86 : vector<1x9x81xf32> to vector<9x81xf32>
    %cst_22 = arith.constant dense<0.000000e+00> : vector<9x256xf32>
    %88 = tpu.matmul %87, %67, %cst_22 {dimension_numbers = #tpu.dot_dimension_numbers<[1], [0], [0], [1], [0, 0, 1, 1], [], []>} : vector<9x81xf32>, vector<81x256xf32>, vector<9x256xf32> -> vector<9x256xf32>
    %89 = arith.mulf %85, %88 : vector<9x256xf32>
    %cst_23 = arith.constant dense<0.000000e+00> : vector<256xf32>
    %90 = vector.multi_reduction <add>, %89, %cst_23 [0] : vector<9x256xf32> to vector<256xf32>
    %91 = vector.shape_cast %90 : vector<256xf32> to vector<1x256xf32>
    %c1 = arith.constant 1 : index
    %c0_24 = arith.constant 0 : index
    %c0_25 = arith.constant 0 : index
    %92 = vector.load %arg2[%c1, %c0_24, %c0_25] : memref<3x9x81xf32, #tpu.memory_space<vmem>>, vector<1x9x81xf32>
    %93 = vector.shape_cast %92 : vector<1x9x81xf32> to vector<9x81xf32>
    %cst_26 = arith.constant dense<0.000000e+00> : vector<9x256xf32>
    %94 = tpu.matmul %93, %67, %cst_26 {dimension_numbers = #tpu.dot_dimension_numbers<[1], [0], [0], [1], [0, 0, 1, 1], [], []>} : vector<9x81xf32>, vector<81x256xf32>, vector<9x256xf32> -> vector<9x256xf32>
    %95 = arith.mulf %85, %94 : vector<9x256xf32>
    %cst_27 = arith.constant dense<0.000000e+00> : vector<256xf32>
    %96 = vector.multi_reduction <add>, %95, %cst_27 [0] : vector<9x256xf32> to vector<256xf32>
    %97 = vector.shape_cast %96 : vector<256xf32> to vector<1x256xf32>
    %c2 = arith.constant 2 : index
    %c0_28 = arith.constant 0 : index
    %c0_29 = arith.constant 0 : index
    %98 = vector.load %arg2[%c2, %c0_28, %c0_29] : memref<3x9x81xf32, #tpu.memory_space<vmem>>, vector<1x9x81xf32>
    %99 = vector.shape_cast %98 : vector<1x9x81xf32> to vector<9x81xf32>
    %cst_30 = arith.constant dense<0.000000e+00> : vector<9x256xf32>
    %100 = tpu.matmul %99, %67, %cst_30 {dimension_numbers = #tpu.dot_dimension_numbers<[1], [0], [0], [1], [0, 0, 1, 1], [], []>} : vector<9x81xf32>, vector<81x256xf32>, vector<9x256xf32> -> vector<9x256xf32>
    %101 = arith.mulf %85, %100 : vector<9x256xf32>
    %cst_31 = arith.constant dense<0.000000e+00> : vector<256xf32>
    %102 = vector.multi_reduction <add>, %101, %cst_31 [0] : vector<9x256xf32> to vector<256xf32>
    %103 = vector.shape_cast %102 : vector<256xf32> to vector<1x256xf32>
    %104 = tpu.concatenate %91, %97, %103 in 0 : vector<1x256xf32>, vector<1x256xf32>, vector<1x256xf32> -> vector<3x256xf32>
    %c0_32 = arith.constant 0 : index
    %c0_33 = arith.constant 0 : index
    %c0_34 = arith.constant 0 : index
    %105 = vector.load %arg4[%c0_32, %c0_33, %c0_34] : memref<1x3x256xf32, #tpu.memory_space<vmem>>, vector<1x3x256xf32>
    %106 = vector.shape_cast %105 : vector<1x3x256xf32> to vector<3x256xf32>
    %107 = vector.shape_cast %104 : vector<3x256xf32> to vector<1x3x256xf32>
    tpu.vector_store %arg4[%c0_32, %c0_33, %c0_34], %107 {strides = array<i32>} : memref<1x3x256xf32, #tpu.memory_space<vmem>>, vector<1x3x256xf32>,
    return
  }
  func.func @transform_0(%arg0: i32, %arg1: i32) -> (i32, i32, i32) {
    %c0_i32 = arith.constant 0 : i32
    %c0_i32_0 = arith.constant 0 : i32
    %c0_i32_1 = arith.constant 0 : i32
    %c0_i32_2 = arith.constant 0 : i32
    return %c0_i32, %c0_i32_0, %c0_i32_1 : i32, i32, i32
  }
  func.func @transform_1(%arg0: i32, %arg1: i32) -> (i32, i32, i32) {
    %c0_i32 = arith.constant 0 : i32
    %c0_i32_0 = arith.constant 0 : i32
    return %arg0, %c0_i32, %arg1 : i32, i32, i32
  }
  func.func @transform_2(%arg0: i32, %arg1: i32) -> (i32, i32, i32) {
    %c0_i32 = arith.constant 0 : i32
    %c0_i32_0 = arith.constant 0 : i32
    return %arg0, %c0_i32, %arg1 : i32, i32, i32
  }
}

</mosaic_0001>

<llo_original>
// kernel: trilinear_forward.1
$region0: #{trilinear_forward.1}
  #allocation0 [shape = 'u32[]', space=smem, size = 0x4, offset = 0x4, fixed_abs, tag = 'smem constant byte address 0x4 - core index']
  #allocation1 [shape = 'u32[72,128]{1,0:T(1,128)}', space=vmem, size = 0x9000, scoped, tag = 'internal scratch']
  %s0 = inlined_call_operand.vmem [shape: f32[3,9,81], index: 0, kind: input, shape index: {}]
  %s1 = inlined_call_operand.vmem [shape: f32[2,3,256], index: 1, kind: input, shape index: {}]
  %s2 = inlined_call_operand.vmem [shape: f32[2,3,256], index: 2, kind: output, shape index: {}]
  %s3 = sld [smem:[#allocation0]]
  $region41: #{trilinear_forward.1} parent=0
    _
  %s5 = ssub.s32 1, %s3
  %s6 = scalar_select 0, %s5, %s3
  loop: start=0, step=1, limit=4
  $region2: #{trilinear_forward.1} parent=0 // loop_pre_header
    _
  $region3: #{trilinear_forward.1} parent=0 // loop_header
    %s8 = sphi 0, %s12
    %p9 = scmp.ge.s32.totalorder %s8, 4
    %s15 = sphi 0, %s27
    %s16 = sphi 0, %s23
    %s17 = sphi 0, %s15
    %s18 = sphi 0, %s16
    %s19 = sphi 0, %s17
    %s20 = sphi 0, %s18
    %s28 = sphi 0, %s28
    %s30 = sphi 0, %s28
    %s31 = sphi 0, %s30
    %s45 = sphi 0, %s31
    %s53 = sphi 0, %s55
    %s56 = sphi 0, %s53
    %s57 = sphi 0, %s56
    %s73 = sphi 0, %s57
    %s81 = sphi 0, %s83
    %s84 = sphi 0, %s81
    %s85 = sphi 0, %s84
    %s101 = sphi 0, %s85
  $region4: #{trilinear_forward.1} parent=0 // loop_header_branch
    %11 = sbr.rel (%p9) target = $region8
  $region5: #{trilinear_forward.1} parent=0 // loop_body
    %s13 = ssub.s32 %s8, 1
    %s14 = ssub.s32 %s8, 2
    %s21 = sadd.s32 1, %s16
    %p22 = scmp.ge.s32.totalorder %s21, 1
    %s23 = scalar_select %p22, 0, %s21
    %s24 = sadd.s32 1, %s15
    %s25 = scalar_select %p22, %s24, %s15
    %p26 = scmp.ge.s32.totalorder %s25, 2
    %s27 = scalar_select %p26, 0, %s25
    %s29 = sadd.s32 %s28, 1
    %p32 = scmp.eq.s32.totalorder %s8, 1
    %p33 = scmp.ne.s32.totalorder %s28, %s30
    %p34 = scmp.eq.s32.totalorder %s8, 0
    %p35 = por %p33, %p34
    %p36 = scmp.ne.s32.totalorder %s28, %s30
    %p37 = scmp.eq.s32.totalorder %s13, 1
    %p38 = por %p36, %p37
    %p39 = scmp.ne.s32.totalorder %s30, %s31
    %p40 = scmp.eq.s32.totalorder %s13, 0
    %p41 = por %p39, %p40
    %p42 = scmp.ne.s32.totalorder %s30, %s31
    %p43 = scmp.eq.s32.totalorder %s14, 1
    %p44 = por %p42, %p43
    %p46 = scmp.ne.s32.totalorder %s31, %s45
    %p47 = scmp.eq.s32.totalorder %s14, 0
    %p48 = por %p46, %p47
    %s49 = ssub.s32 %s15, %s27
    %s50 = ssub.s32 %s16, %s23
    %s51 = sor.u32 %s49, %s50
    %p52 = scmp.eq.s32.totalorder %s51, 0
    %s54 = sadd.s32 %s53, 1
    %s55 = scalar_select %p52, %s53, %s54
    %p58 = pneg %p52
    %p59 = scmp.eq.s32.totalorder %s8, 1
    %p60 = por %p58, %p59
    %p61 = scmp.ne.s32.totalorder %s53, %s56
    %p62 = scmp.eq.s32.totalorder %s8, 0
    %p63 = por %p61, %p62
    %p64 = scmp.ne.s32.totalorder %s53, %s56
    %p65 = scmp.eq.s32.totalorder %s13, 1
    %p66 = por %p64, %p65
    %p67 = scmp.ne.s32.totalorder %s56, %s57
    %p68 = scmp.eq.s32.totalorder %s13, 0
    %p69 = por %p67, %p68
    %p70 = scmp.ne.s32.totalorder %s56, %s57
    %p71 = scmp.eq.s32.totalorder %s14, 1
    %p72 = por %p70, %p71
    %p74 = scmp.ne.s32.totalorder %s57, %s73
    %p75 = scmp.eq.s32.totalorder %s14, 0
    %p76 = por %p74, %p75
    %s77 = ssub.s32 %s15, %s27
    %s78 = ssub.s32 %s16, %s23
    %s79 = sor.u32 %s77, %s78
    %p80 = scmp.eq.s32.totalorder %s79, 0
    %s82 = sadd.s32 %s81, 1
    %s83 = scalar_select %p80, %s81, %s82
    %p86 = pneg %p80
    %p87 = scmp.eq.s32.totalorder %s8, 1
    %p88 = por %p86, %p87
    %p89 = scmp.ne.s32.totalorder %s81, %s84
    %p90 = scmp.eq.s32.totalorder %s8, 0
    %p91 = por %p89, %p90
    %p92 = scmp.ne.s32.totalorder %s81, %s84
    %p93 = scmp.eq.s32.totalorder %s13, 1
    %p94 = por %p92, %p93
    %p95 = scmp.ne.s32.totalorder %s84, %s85
    %p96 = scmp.eq.s32.totalorder %s13, 0
    %p97 = por %p95, %p96
    %p98 = scmp.ne.s32.totalorder %s84, %s85
    %p99 = scmp.eq.s32.totalorder %s14, 1
    %p100 = por %p98, %p99
    %p102 = scmp.ne.s32.totalorder %s85, %s101
    %p103 = scmp.eq.s32.totalorder %s14, 0
    %p104 = por %p102, %p103
    %p105 = scmp.le.s32.totalorder 1, %s8
    %p106 = scmp.lt.s32.totalorder %s8, 3
    %p107 = pnand %p105, %p106
    %p108 = pneg %p107
    // Predicated region
    $region9: #{trilinear_forward.1} parent=5 // pred_check
      _
    $region10: #{trilinear_forward.1} parent=5 // pred_check_branch
      %110 = sbr.rel (%p107) target = $region12
    $region11: #{trilinear_forward.1} parent=5 // pred_region
      %s111 = ssub.s32 %s8, 1
      // Predicated region
      $region13: #{trilinear_forward.1} parent=11 // pred_check
        %p112 = pneg %p41
      $region14: #{trilinear_forward.1} parent=11 // pred_check_branch
        %114 = sbr.rel (%p112) target = $region16
      $region15: #{trilinear_forward.1} parent=11 // pred_region
        _
      $region16: #{trilinear_forward.1} parent=11 // pred_fallthru
        _
    $region12: #{trilinear_forward.1} parent=5 // pred_fallthru
      _
    %p115 = scmp.lt.s32.totalorder %s8, 2
    // Predicated region
    $region17: #{trilinear_forward.1} parent=5 // pred_check
      %p116 = pneg %p115
    $region18: #{trilinear_forward.1} parent=5 // pred_check_branch
      %118 = sbr.rel (%p116) target = $region20
    $region19: #{trilinear_forward.1} parent=5 // pred_region
      // Predicated region
      $region21: #{trilinear_forward.1} parent=19 // pred_check
        %p119 = pneg %p63
      $region22: #{trilinear_forward.1} parent=19 // pred_check_branch
        %121 = sbr.rel (%p119) target = $region24
      $region23: #{trilinear_forward.1} parent=19 // pred_region
        %s122 = smul.u32 2, %s16
        %p123 = scmp.lt.s32.totalorder %s15, 1
        %s124 = scalar_select %p123, %s15, 1
        %p125 = scmp.lt.s32.totalorder %s122, 1
        %s126 = scalar_select %p125, %s122, 1
        %s127 = smul.addr %s124, 2
        %s128 = sadd.s32 %s126, %s127
        %s129 = smul.addr %s128, 4
        %s130 = scalar_lea.vmem %s1, %s129
        %s131 = smul.u32 2, %s16
      $region24: #{trilinear_forward.1} parent=19 // pred_fallthru
        _
    $region20: #{trilinear_forward.1} parent=5 // pred_fallthru
      _
    %p132 = scmp.le.s32.totalorder 1, %s8
    %p133 = scmp.lt.s32.totalorder %s8, 3
    %p134 = pnand %p132, %p133
    %p135 = pneg %p134
    // Predicated region
    $region25: #{trilinear_forward.1} parent=5 // pred_check
      _
    $region26: #{trilinear_forward.1} parent=5 // pred_check_branch
      %137 = sbr.rel (%p134) target = $region28
    $region27: #{trilinear_forward.1} parent=5 // pred_region
      %s138 = ssub.s32 %s8, 1
      %p139 = pneg %p41
      %p140 = pneg %p38
      %s141 = smul.u32 2, %s18
      %p142 = scmp.lt.s32.totalorder %s17, 1
      %s143 = scalar_select %p142, %s17, 1
      %p144 = scmp.lt.s32.totalorder %s141, 1
      %s145 = scalar_select %p144, %s141, 1
      %s146 = smul.addr %s143, 2
      %s147 = sadd.s32 %s145, %s146
      %s148 = smul.addr %s147, 4
      %s149 = scalar_lea.vmem %s1, %s148
      %p150 = pneg %p69
      %p151 = pneg %p66
      %p152 = pneg %p97
      %p153 = pneg %p94
      %s154 = smul.u32 2, %s18
      %p155 = scmp.lt.s32.totalorder %s17, 1
      %s156 = scalar_select %p155, %s17, 1
      %p157 = scmp.lt.s32.totalorder %s154, 1
      %s158 = scalar_select %p157, %s154, 1
      %s159 = smul.addr %s156, 2
      %s160 = sadd.s32 %s158, %s159
      %s161 = smul.addr %s160, 4
      %s162 = scalar_lea.vmem %s2, %s161
      %s163 = smul.u32 2, %s18
      %p164 = scmp.lt.s32.totalorder %s17, 1
      %s165 = scalar_select %p164, %s17, 1
      %p166 = scmp.lt.s32.totalorder %s163, 1
      %s167 = scalar_select %p166, %s163, 1
      %s168 = smul.addr %s165, 2
      %s169 = sadd.s32 %s167, %s168
      %s170 = smul.addr %s169, 4
      %s171 = scalar_lea.vmem %s1, %s170
      %s172 = smul.u32 2, %s18
      %s173 = smul.u32 2, %s18
      %p174 = scmp.lt.s32.totalorder %s17, 1
      %s175 = scalar_select %p174, %s17, 1
      %p176 = scmp.lt.s32.totalorder %s173, 1
      %s177 = scalar_select %p176, %s173, 1
      %s178 = smul.addr %s175, 2
      %s179 = sadd.s32 %s177, %s178
      %s180 = smul.addr %s179, 4
      %s181 = scalar_lea.vmem %s2, %s180
      %s182 = smul.u32 2, %s18
      %v183 = vld [vmem:[%s171] sm:$0x77]
      %v184 = vmul.f32 %v183, 7.999992
      %v185 = vfloor.f32 %v184
      %v186 = vmax.f32 %v185, 0.0
      %v187 = vmin.f32 %v186, 7.0
      %v188 = vsub.f32 %v184, %v187
      %v189 = vcvt.f32.s32.to.zero.pseudo %v187
      %v190 = vlaneseq
      %v191 = vshrl.u32 %v190, 7
      %v192 = vadd.s32 %v191, 8
      %v193 = vadd.s32 %v191, 16
      %v194 = vadd.s32 %v191, 24
      %v195 = vadd.s32 %v191, 32
      %v196 = vadd.s32 %v191, 40
      %v197 = vadd.s32 %v191, 48
      %v198 = vadd.s32 %v191, 56
      %v199 = vadd.s32 %v191, 64
      %v200 = vadd.s32 %v191, 72
      %v201 = vadd.s32 %v191, 80
      %v202 = vmul.u32 %v189, 9
      %v203 = vrot.slane %v189, 7
      %v204 = vadd.s32 %v202, %v203
      %v205 = vperm.slane %v204, 1
      %v206 = vperm.slane %v204, 5
      %v207 = vperm.slane %v205, 1
      %v208 = vperm.slane %v206, 1
      %vm209 = vcmp.eq.s32.totalorder %v191, %v207
      %vm210 = vcmp.eq.s32.totalorder %v191, %v208
      %vm211 = vcmp.eq.s32.totalorder %v192, %v207
      %vm212 = vcmp.eq.s32.totalorder %v192, %v208
      %vm213 = vcmp.eq.s32.totalorder %v193, %v207
      %vm214 = vcmp.eq.s32.totalorder %v193, %v208
      %vm215 = vcmp.eq.s32.totalorder %v194, %v207
      %vm216 = vcmp.eq.s32.totalorder %v194, %v208
      %vm217 = vcmp.eq.s32.totalorder %v195, %v207
      %vm218 = vcmp.eq.s32.totalorder %v195, %v208
      %vm219 = vcmp.eq.s32.totalorder %v196, %v207
      %vm220 = vcmp.eq.s32.totalorder %v196, %v208
      %vm221 = vcmp.eq.s32.totalorder %v197, %v207
      %vm222 = vcmp.eq.s32.totalorder %v197, %v208
      %vm223 = vcmp.eq.s32.totalorder %v198, %v207
      %vm224 = vcmp.eq.s32.totalorder %v198, %v208
      %vm225 = vcmp.eq.s32.totalorder %v199, %v207
      %vm226 = vcmp.eq.s32.totalorder %v199, %v208
      %vm227 = vcmp.eq.s32.totalorder %v200, %v207
      %vm228 = vcmp.eq.s32.totalorder %v200, %v208
      %vm229 = vcmp.eq.s32.totalorder %v201, %v207
      %vm230 = vcmp.eq.s32.totalorder %v201, %v208
      %v231 = vsub.f32 1.0, %v188
      %v233 = vrot.slane %v231, 7
      %v235 = vmul.f32 %v231, %v233
      %v237 = vperm.slane %v235, 1
      %v238 = vperm.slane %v235, 5
      %v241 = vperm.slane %v237, 1
      %v242 = vperm.slane %v238, 1
      %v243 = vsel %vm209, %v241, 0.0
      %v244 = vsel %vm210, %v242, 0.0
      %v245 = vsel %vm211, %v241, 0.0
      %v246 = vsel %vm212, %v242, 0.0
      %v247 = vsel %vm213, %v241, 0.0
      %v248 = vsel %vm214, %v242, 0.0
      %v249 = vsel %vm215, %v241, 0.0
      %v250 = vsel %vm216, %v242, 0.0
      %v251 = vsel %vm217, %v241, 0.0
      %v252 = vsel %vm218, %v242, 0.0
      %v253 = vsel %vm219, %v241, 0.0
      %v254 = vsel %vm220, %v242, 0.0
      %v255 = vsel %vm221, %v241, 0.0
      %v256 = vsel %vm222, %v242, 0.0
      %v257 = vsel %vm223, %v241, 0.0
      %v258 = vsel %vm224, %v242, 0.0
      %v259 = vsel %vm225, %v241, 0.0
      %v260 = vsel %vm226, %v242, 0.0
      %v261 = vsel %vm227, %v241, 0.0
      %v262 = vsel %vm228, %v242, 0.0
      %v263 = vsel %vm229, %v241, 0.0
      %v264 = vsel %vm230, %v242, 0.0
      %v265 = vadd.s32 %v204, 1
      %v266 = vperm.slane %v265, 1
      %v267 = vperm.slane %v265, 5
      %v268 = vperm.slane %v266, 1
      %v269 = vperm.slane %v267, 1
      %vm270 = vcmp.eq.s32.totalorder %v191, %v268
      %vm271 = vcmp.eq.s32.totalorder %v191, %v269
      %vm272 = vcmp.eq.s32.totalorder %v192, %v268
      %vm273 = vcmp.eq.s32.totalorder %v192, %v269
      %vm274 = vcmp.eq.s32.totalorder %v193, %v268
      %vm275 = vcmp.eq.s32.totalorder %v193, %v269
      %vm276 = vcmp.eq.s32.totalorder %v194, %v268
      %vm277 = vcmp.eq.s32.totalorder %v194, %v269
      %vm278 = vcmp.eq.s32.totalorder %v195, %v268
      %vm279 = vcmp.eq.s32.totalorder %v195, %v269
      %vm280 = vcmp.eq.s32.totalorder %v196, %v268
      %vm281 = vcmp.eq.s32.totalorder %v196, %v269
      %vm282 = vcmp.eq.s32.totalorder %v197, %v268
      %vm283 = vcmp.eq.s32.totalorder %v197, %v269
      %vm284 = vcmp.eq.s32.totalorder %v198, %v268
      %vm285 = vcmp.eq.s32.totalorder %v198, %v269
      %vm286 = vcmp.eq.s32.totalorder %v199, %v268
      %vm287 = vcmp.eq.s32.totalorder %v199, %v269
      %vm288 = vcmp.eq.s32.totalorder %v200, %v268
      %vm289 = vcmp.eq.s32.totalorder %v200, %v269
      %vm290 = vcmp.eq.s32.totalorder %v201, %v268
      %vm291 = vcmp.eq.s32.totalorder %v201, %v269
      %v293 = vrot.slane %v188, 7
      %v295 = vmul.f32 %v231, %v293
      %v297 = vperm.slane %v295, 1
      %v298 = vperm.slane %v295, 5
      %v301 = vperm.slane %v297, 1
      %v302 = vperm.slane %v298, 1
      %v303 = vsel %vm270, %v301, 0.0
      %v304 = vsel %vm271, %v302, 0.0
      %v305 = vsel %vm272, %v301, 0.0
      %v306 = vsel %vm273, %v302, 0.0
      %v307 = vsel %vm274, %v301, 0.0
      %v308 = vsel %vm275, %v302, 0.0
      %v309 = vsel %vm276, %v301, 0.0
      %v310 = vsel %vm277, %v302, 0.0
      %v311 = vsel %vm278, %v301, 0.0
      %v312 = vsel %vm279, %v302, 0.0
      %v313 = vsel %vm280, %v301, 0.0
      %v314 = vsel %vm281, %v302, 0.0
      %v315 = vsel %vm282, %v301, 0.0
      %v316 = vsel %vm283, %v302, 0.0
      %v317 = vsel %vm284, %v301, 0.0
      %v318 = vsel %vm285, %v302, 0.0
      %v319 = vsel %vm286, %v301, 0.0
      %v320 = vsel %vm287, %v302, 0.0
      %v321 = vsel %vm288, %v301, 0.0
      %v322 = vsel %vm289, %v302, 0.0
      %v323 = vsel %vm290, %v301, 0.0
      %v324 = vsel %vm291, %v302, 0.0
      %v325 = vadd.f32 %v243, %v303
      %v326 = vadd.f32 %v244, %v304
      %v327 = vadd.f32 %v245, %v305
      %v328 = vadd.f32 %v246, %v306
      %v329 = vadd.f32 %v247, %v307
      %v330 = vadd.f32 %v248, %v308
      %v331 = vadd.f32 %v249, %v309
      %v332 = vadd.f32 %v250, %v310
      %v333 = vadd.f32 %v251, %v311
      %v334 = vadd.f32 %v252, %v312
      %v335 = vadd.f32 %v253, %v313
      %v336 = vadd.f32 %v254, %v314
      %v337 = vadd.f32 %v255, %v315
      %v338 = vadd.f32 %v256, %v316
      %v339 = vadd.f32 %v257, %v317
      %v340 = vadd.f32 %v258, %v318
      %v341 = vadd.f32 %v259, %v319
      %v342 = vadd.f32 %v260, %v320
      %v343 = vadd.f32 %v261, %v321
      %v344 = vadd.f32 %v262, %v322
      %v345 = vadd.f32 %v263, %v323
      %v346 = vadd.f32 %v264, %v324
      %v347 = vadd.s32 %v204, 9
      %v348 = vperm.slane %v347, 1
      %v349 = vperm.slane %v347, 5
      %v350 = vperm.slane %v348, 1
      %v351 = vperm.slane %v349, 1
      %vm352 = vcmp.eq.s32.totalorder %v191, %v350
      %vm353 = vcmp.eq.s32.totalorder %v191, %v351
      %vm354 = vcmp.eq.s32.totalorder %v192, %v350
      %vm355 = vcmp.eq.s32.totalorder %v192, %v351
      %vm356 = vcmp.eq.s32.totalorder %v193, %v350
      %vm357 = vcmp.eq.s32.totalorder %v193, %v351
      %vm358 = vcmp.eq.s32.totalorder %v194, %v350
      %vm359 = vcmp.eq.s32.totalorder %v194, %v351
      %vm360 = vcmp.eq.s32.totalorder %v195, %v350
      %vm361 = vcmp.eq.s32.totalorder %v195, %v351
      %vm362 = vcmp.eq.s32.totalorder %v196, %v350
      %vm363 = vcmp.eq.s32.totalorder %v196, %v351
      %vm364 = vcmp.eq.s32.totalorder %v197, %v350
      %vm365 = vcmp.eq.s32.totalorder %v197, %v351
      %vm366 = vcmp.eq.s32.totalorder %v198, %v350
      %vm367 = vcmp.eq.s32.totalorder %v198, %v351
      %vm368 = vcmp.eq.s32.totalorder %v199, %v350
      %vm369 = vcmp.eq.s32.totalorder %v199, %v351
      %vm370 = vcmp.eq.s32.totalorder %v200, %v350
      %vm371 = vcmp.eq.s32.totalorder %v200, %v351
      %vm372 = vcmp.eq.s32.totalorder %v201, %v350
      %vm373 = vcmp.eq.s32.totalorder %v201, %v351
      %v374 = vmul.f32 %v188, %v233
      %v376 = vperm.slane %v374, 1
      %v377 = vperm.slane %v374, 5
      %v380 = vperm.slane %v376, 1
      %v381 = vperm.slane %v377, 1
      %v382 = vsel %vm352, %v380, 0.0
      %v383 = vsel %vm353, %v381, 0.0
      %v384 = vsel %vm354, %v380, 0.0
      %v385 = vsel %vm355, %v381, 0.0
      %v386 = vsel %vm356, %v380, 0.0
      %v387 = vsel %vm357, %v381, 0.0
      %v388 = vsel %vm358, %v380, 0.0
      %v389 = vsel %vm359, %v381, 0.0
      %v390 = vsel %vm360, %v380, 0.0
      %v391 = vsel %vm361, %v381, 0.0
      %v392 = vsel %vm362, %v380, 0.0
      %v393 = vsel %vm363, %v381, 0.0
      %v394 = vsel %vm364, %v380, 0.0
      %v395 = vsel %vm365, %v381, 0.0
      %v396 = vsel %vm366, %v380, 0.0
      %v397 = vsel %vm367, %v381, 0.0
      %v398 = vsel %vm368, %v380, 0.0
      %v399 = vsel %vm369, %v381, 0.0
      %v400 = vsel %vm370, %v380, 0.0
      %v401 = vsel %vm371, %v381, 0.0
      %v402 = vsel %vm372, %v380, 0.0
      %v403 = vsel %vm373, %v381, 0.0
      %v404 = vadd.f32 %v325, %v382
      %v405 = vadd.f32 %v326, %v383
      %v406 = vadd.f32 %v327, %v384
      %v407 = vadd.f32 %v328, %v385
      %v408 = vadd.f32 %v329, %v386
      %v409 = vadd.f32 %v330, %v387
      %v410 = vadd.f32 %v331, %v388
      %v411 = vadd.f32 %v332, %v389
      %v412 = vadd.f32 %v333, %v390
      %v413 = vadd.f32 %v334, %v391
      %v414 = vadd.f32 %v335, %v392
      %v415 = vadd.f32 %v336, %v393
      %v416 = vadd.f32 %v337, %v394
      %v417 = vadd.f32 %v338, %v395
      %v418 = vadd.f32 %v339, %v396
      %v419 = vadd.f32 %v340, %v397
      %v420 = vadd.f32 %v341, %v398
      %v421 = vadd.f32 %v342, %v399
      %v422 = vadd.f32 %v343, %v400
      %v423 = vadd.f32 %v344, %v401
      %v424 = vadd.f32 %v345, %v402
      %v425 = vadd.f32 %v346, %v403
      %v426 = vadd.s32 %v347, 1
      %v427 = vperm.slane %v426, 1
      %v428 = vperm.slane %v426, 5
      %v429 = vperm.slane %v427, 1
      %v430 = vperm.slane %v428, 1
      %vm431 = vcmp.eq.s32.totalorder %v191, %v429
      %vm432 = vcmp.eq.s32.totalorder %v191, %v430
      %vm433 = vcmp.eq.s32.totalorder %v192, %v429
      %vm434 = vcmp.eq.s32.totalorder %v192, %v430
      %vm435 = vcmp.eq.s32.totalorder %v193, %v429
      %vm436 = vcmp.eq.s32.totalorder %v193, %v430
      %vm437 = vcmp.eq.s32.totalorder %v194, %v429
      %vm438 = vcmp.eq.s32.totalorder %v194, %v430
      %vm439 = vcmp.eq.s32.totalorder %v195, %v429
      %vm440 = vcmp.eq.s32.totalorder %v195, %v430
      %vm441 = vcmp.eq.s32.totalorder %v196, %v429
      %vm442 = vcmp.eq.s32.totalorder %v196, %v430
      %vm443 = vcmp.eq.s32.totalorder %v197, %v429
      %vm444 = vcmp.eq.s32.totalorder %v197, %v430
      %vm445 = vcmp.eq.s32.totalorder %v198, %v429
      %vm446 = vcmp.eq.s32.totalorder %v198, %v430
      %vm447 = vcmp.eq.s32.totalorder %v199, %v429
      %vm448 = vcmp.eq.s32.totalorder %v199, %v430
      %vm449 = vcmp.eq.s32.totalorder %v200, %v429
      %vm450 = vcmp.eq.s32.totalorder %v200, %v430
      %vm451 = vcmp.eq.s32.totalorder %v201, %v429
      %vm452 = vcmp.eq.s32.totalorder %v201, %v430
      %v453 = vmul.f32 %v188, %v293
      %v455 = vperm.slane %v453, 1
      %v456 = vperm.slane %v453, 5
      %v459 = vperm.slane %v455, 1
      %v460 = vperm.slane %v456, 1
      %v461 = vsel %vm431, %v459, 0.0
      %v462 = vsel %vm432, %v460, 0.0
      %v463 = vsel %vm433, %v459, 0.0
      %v464 = vsel %vm434, %v460, 0.0
      %v465 = vsel %vm435, %v459, 0.0
      %v466 = vsel %vm436, %v460, 0.0
      %v467 = vsel %vm437, %v459, 0.0
      %v468 = vsel %vm438, %v460, 0.0
      %v469 = vsel %vm439, %v459, 0.0
      %v470 = vsel %vm440, %v460, 0.0
      %v471 = vsel %vm441, %v459, 0.0
      %v472 = vsel %vm442, %v460, 0.0
      %v473 = vsel %vm443, %v459, 0.0
      %v474 = vsel %vm444, %v460, 0.0
      %v475 = vsel %vm445, %v459, 0.0
      %v476 = vsel %vm446, %v460, 0.0
      %v477 = vsel %vm447, %v459, 0.0
      %v478 = vsel %vm448, %v460, 0.0
      %v479 = vsel %vm449, %v459, 0.0
      %v480 = vsel %vm450, %v460, 0.0
      %v481 = vsel %vm451, %v459, 0.0
      %v482 = vsel %vm452, %v460, 0.0
      %v483 = vadd.f32 %v404, %v461
      %v484 = vadd.f32 %v405, %v462
      %v485 = vadd.f32 %v406, %v463
      %v486 = vadd.f32 %v407, %v464
      %v487 = vadd.f32 %v408, %v465
      %v488 = vadd.f32 %v409, %v466
      %v489 = vadd.f32 %v410, %v467
      %v490 = vadd.f32 %v411, %v468
      %v491 = vadd.f32 %v412, %v469
      %v492 = vadd.f32 %v413, %v470
      %v493 = vadd.f32 %v414, %v471
      %v494 = vadd.f32 %v415, %v472
      %v495 = vadd.f32 %v416, %v473
      %v496 = vadd.f32 %v417, %v474
      %v497 = vadd.f32 %v418, %v475
      %v498 = vadd.f32 %v419, %v476
      %v499 = vadd.f32 %v420, %v477
      %v500 = vadd.f32 %v421, %v478
      %v501 = vadd.f32 %v422, %v479
      %v502 = vadd.f32 %v423, %v480
      %v503 = vadd.f32 %v424, %v481
      %v504 = vadd.f32 %v425, %v482
      %v505 = vperm.slane %v189, 2
      %v506 = vperm.slane %v189, 6
      %v507 = vperm.slane %v505, 2
      %v508 = vperm.slane %v506, 2
      %vm509 = vcmp.eq.s32.totalorder %v191, %v507
      %vm510 = vcmp.eq.s32.totalorder %v191, %v508
      %vm511 = vcmp.eq.s32.totalorder %v192, %v507
      %vm512 = vcmp.eq.s32.totalorder %v192, %v508
      %v513 = vperm.slane %v231, 2
      %v514 = vperm.slane %v231, 6
      %v517 = vperm.slane %v513, 2
      %v518 = vperm.slane %v514, 2
      %v519 = vsel %vm509, %v517, 0.0
      %v520 = vsel %vm510, %v518, 0.0
      %v521 = vsel %vm511, %v517, 0.0
      %v522 = vsel %vm512, %v518, 0.0
      %v523 = vadd.s32 %v189, 1
      %v524 = vperm.slane %v523, 2
      %v525 = vperm.slane %v523, 6
      %v526 = vperm.slane %v524, 2
      %v527 = vperm.slane %v525, 2
      %vm528 = vcmp.eq.s32.totalorder %v191, %v526
      %vm529 = vcmp.eq.s32.totalorder %v191, %v527
      %vm530 = vcmp.eq.s32.totalorder %v192, %v526
      %vm531 = vcmp.eq.s32.totalorder %v192, %v527
      %v532 = vperm.slane %v188, 2
      %v533 = vperm.slane %v188, 6
      %v536 = vperm.slane %v532, 2
      %v537 = vperm.slane %v533, 2
      %v538 = vsel %vm528, %v536, 0.0
      %v539 = vsel %vm529, %v537, 0.0
      %v540 = vsel %vm530, %v536, 0.0
      %v541 = vsel %vm531, %v537, 0.0
      %v542 = vadd.f32 %v519, %v538
      %v543 = vadd.f32 %v520, %v539
      %v544 = vadd.f32 %v521, %v540
      %v545 = vadd.f32 %v522, %v541
      %v546 = vld [vmem:[%s0] sm:$0xff]
      %v547 = vld [vmem:[%s0 + $0x8] sm:$0x1]
      %vm548 = vcmask 662528
      %v550 = vsel %vm548, %v546, 0
      %v553 = vsel %vm548, %v547, 0
      %vm555 = vcmask 1040384
      %v557 = vsel %vm555, %v503, 0
      %v560 = vsel %vm555, %v504, 0
      %562 = vmatpush.msra.mxu0 0.0
      %563 = vmatpush.msra.mxu0 0.0
      %564 = vmatpush.msra.mxu0 0.0
      %565 = vmatpush.msra.mxu0 0.0
      %566 = vmatpush.msra.mxu0 0.0
      %567 = vmatpush.msra.mxu0 %v557
      %568 = vmatpush.msra.mxu0 %v501
      %569 = vmatpush.msra.mxu0 %v499
      %570 = vmatpush.msra.mxu0 %v497
      %571 = vmatpush.msra.mxu0 %v495
      %572 = vmatpush.msra.mxu0 %v493
      %573 = vmatpush.msra.mxu0 %v491
      %574 = vmatpush.msra.mxu0 %v489
      %575 = vmatpush.msra.mxu0 %v487
      %576 = vmatpush.msra.mxu0 %v485
      %577 = vmatpush.msra.mxu0 %v483
      %578 = vmatmul.f32.gmra.mxu0 %v550
      %v579 = vpop.f32.mrf.mxu0
      %v580 = vadd.f32 0.0, %v579
      %581 = vmatmul.f32.gmra.mxu0 %v553
      %v582 = vpop.f32.mrf.mxu0
      %v583 = vadd.f32 0.0, %v582
      %584 = vdwg.mxu0
      %585 = vmatpush.msra.mxu0 0.0
      %586 = vmatpush.msra.mxu0 0.0
      %587 = vmatpush.msra.mxu0 0.0
      %588 = vmatpush.msra.mxu0 0.0
      %589 = vmatpush.msra.mxu0 0.0
      %590 = vmatpush.msra.mxu0 %v560
      %591 = vmatpush.msra.mxu0 %v502
      %592 = vmatpush.msra.mxu0 %v500
      %593 = vmatpush.msra.mxu0 %v498
      %594 = vmatpush.msra.mxu0 %v496
      %595 = vmatpush.msra.mxu0 %v494
      %596 = vmatpush.msra.mxu0 %v492
      %597 = vmatpush.msra.mxu0 %v490
      %598 = vmatpush.msra.mxu0 %v488
      %599 = vmatpush.msra.mxu0 %v486
      %600 = vmatpush.msra.mxu0 %v484
      %601 = vmatmul.f32.gmra.mxu0 %v550
      %v602 = vpop.f32.mrf.mxu0
      %v603 = vadd.f32 0.0, %v602
      %604 = vmatmul.f32.gmra.mxu0 %v553
      %v605 = vpop.f32.mrf.mxu0
      %v606 = vadd.f32 0.0, %v605
      %607 = vdwg.mxu0
      %v608 = vmul.f32 %v542, %v580
      %v609 = vmul.f32 %v543, %v603
      %v610 = vmul.f32 %v544, %v583
      %v611 = vmul.f32 %v545, %v606
      %v612 = vsel %vm555, %v610, 0.0
      %v613 = vadd.f32 %v608, %v612
      %v614 = vrot.slane %v613, 4
      %v615 = vadd.f32 %v613, %v614
      %v616 = vrot.slane %v615, 2
      %v617 = vadd.f32 %v615, %v616
      %v618 = vrot.slane %v617, 1
      %v619 = vadd.f32 %v617, %v618
      %v620 = vsel %vm555, %v611, 0.0
      %v621 = vadd.f32 %v609, %v620
      %v622 = vrot.slane %v621, 4
      %v623 = vadd.f32 %v621, %v622
      %v624 = vrot.slane %v623, 2
      %v625 = vadd.f32 %v623, %v624
      %v626 = vrot.slane %v625, 1
      %v627 = vadd.f32 %v625, %v626
      %s628 = scalar_lea.vmem %s0, 16
      %v629 = vld [vmem:[%s628] sm:$0xff]
      %v630 = vld [vmem:[%s628 + $0x8] sm:$0x1]
      %v632 = vsel %vm548, %v629, 0
      %v635 = vsel %vm548, %v630, 0
      %637 = vmatpush.msra.mxu0 0.0
      %638 = vmatpush.msra.mxu0 0.0
      %639 = vmatpush.msra.mxu0 0.0
      %640 = vmatpush.msra.mxu0 0.0
      %641 = vmatpush.msra.mxu0 0.0
      %642 = vmatpush.msra.mxu0 %v557
      %643 = vmatpush.msra.mxu0 %v501
      %644 = vmatpush.msra.mxu0 %v499
      %645 = vmatpush.msra.mxu0 %v497
      %646 = vmatpush.msra.mxu0 %v495
      %647 = vmatpush.msra.mxu0 %v493
      %648 = vmatpush.msra.mxu0 %v491
      %649 = vmatpush.msra.mxu0 %v489
      %650 = vmatpush.msra.mxu0 %v487
      %651 = vmatpush.msra.mxu0 %v485
      %652 = vmatpush.msra.mxu0 %v483
      %653 = vmatmul.f32.gmra.mxu0 %v632
      %v654 = vpop.f32.mrf.mxu0
      %v655 = vadd.f32 0.0, %v654
      %656 = vmatmul.f32.gmra.mxu0 %v635
      %v657 = vpop.f32.mrf.mxu0
      %v658 = vadd.f32 0.0, %v657
      %659 = vdwg.mxu0
      %660 = vmatpush.msra.mxu0 0.0
      %661 = vmatpush.msra.mxu0 0.0
      %662 = vmatpush.msra.mxu0 0.0
      %663 = vmatpush.msra.mxu0 0.0
      %664 = vmatpush.msra.mxu0 0.0
      %665 = vmatpush.msra.mxu0 %v560
      %666 = vmatpush.msra.mxu0 %v502
      %667 = vmatpush.msra.mxu0 %v500
      %668 = vmatpush.msra.mxu0 %v498
      %669 = vmatpush.msra.mxu0 %v496
      %670 = vmatpush.msra.mxu0 %v494
      %671 = vmatpush.msra.mxu0 %v492
      %672 = vmatpush.msra.mxu0 %v490
      %673 = vmatpush.msra.mxu0 %v488
      %674 = vmatpush.msra.mxu0 %v486
      %675 = vmatpush.msra.mxu0 %v484
      %676 = vmatmul.f32.gmra.mxu0 %v632
      %v677 = vpop.f32.mrf.mxu0
      %v678 = vadd.f32 0.0, %v677
      %679 = vmatmul.f32.gmra.mxu0 %v635
      %v680 = vpop.f32.mrf.mxu0
      %v681 = vadd.f32 0.0, %v680
      %682 = vdwg.mxu0
      %v683 = vmul.f32 %v542, %v655
      %v684 = vmul.f32 %v543, %v678
      %v685 = vmul.f32 %v544, %v658
      %v686 = vmul.f32 %v545, %v681
      %v687 = vsel %vm555, %v685, 0.0
      %v688 = vadd.f32 %v683, %v687
      %v689 = vrot.slane %v688, 4
      %v690 = vadd.f32 %v688, %v689
      %v691 = vrot.slane %v690, 2
      %v692 = vadd.f32 %v690, %v691
      %v693 = vrot.slane %v692, 1
      %v694 = vadd.f32 %v692, %v693
      %v695 = vsel %vm555, %v686, 0.0
      %v696 = vadd.f32 %v684, %v695
      %v697 = vrot.slane %v696, 4
      %v698 = vadd.f32 %v696, %v697
      %v699 = vrot.slane %v698, 2
      %v700 = vadd.f32 %v698, %v699
      %v701 = vrot.slane %v700, 1
      %v702 = vadd.f32 %v700, %v701
      %s703 = scalar_lea.vmem %s0, 32
      %v704 = vld [vmem:[%s703] sm:$0xff]
      %v705 = vld [vmem:[%s703 + $0x8] sm:$0x1]
      %v707 = vsel %vm548, %v704, 0
      %v710 = vsel %vm548, %v705, 0
      %712 = vmatpush.msra.mxu0 0.0
      %713 = vmatpush.msra.mxu0 0.0
      %714 = vmatpush.msra.mxu0 0.0
      %715 = vmatpush.msra.mxu0 0.0
      %716 = vmatpush.msra.mxu0 0.0
      %717 = vmatpush.msra.mxu0 %v557
      %718 = vmatpush.msra.mxu0 %v501
      %719 = vmatpush.msra.mxu0 %v499
      %720 = vmatpush.msra.mxu0 %v497
      %721 = vmatpush.msra.mxu0 %v495
      %722 = vmatpush.msra.mxu0 %v493
      %723 = vmatpush.msra.mxu0 %v491
      %724 = vmatpush.msra.mxu0 %v489
      %725 = vmatpush.msra.mxu0 %v487
      %726 = vmatpush.msra.mxu0 %v485
      %727 = vmatpush.msra.mxu0 %v483
      %728 = vmatmul.f32.gmra.mxu0 %v707
      %v729 = vpop.f32.mrf.mxu0
      %v730 = vadd.f32 0.0, %v729
      %731 = vmatmul.f32.gmra.mxu0 %v710
      %v732 = vpop.f32.mrf.mxu0
      %v733 = vadd.f32 0.0, %v732
      %734 = vdwg.mxu0
      %735 = vmatpush.msra.mxu0 0.0
      %736 = vmatpush.msra.mxu0 0.0
      %737 = vmatpush.msra.mxu0 0.0
      %738 = vmatpush.msra.mxu0 0.0
      %739 = vmatpush.msra.mxu0 0.0
      %740 = vmatpush.msra.mxu0 %v560
      %741 = vmatpush.msra.mxu0 %v502
      %742 = vmatpush.msra.mxu0 %v500
      %743 = vmatpush.msra.mxu0 %v498
      %744 = vmatpush.msra.mxu0 %v496
      %745 = vmatpush.msra.mxu0 %v494
      %746 = vmatpush.msra.mxu0 %v492
      %747 = vmatpush.msra.mxu0 %v490
      %748 = vmatpush.msra.mxu0 %v488
      %749 = vmatpush.msra.mxu0 %v486
      %750 = vmatpush.msra.mxu0 %v484
      %751 = vmatmul.f32.gmra.mxu0 %v707
      %v752 = vpop.f32.mrf.mxu0
      %v753 = vadd.f32 0.0, %v752
      %754 = vmatmul.f32.gmra.mxu0 %v710
      %v755 = vpop.f32.mrf.mxu0
      %v756 = vadd.f32 0.0, %v755
      %757 = vdwg.mxu0
      %v758 = vmul.f32 %v542, %v730
      %v759 = vmul.f32 %v543, %v753
      %v760 = vmul.f32 %v544, %v733
      %v761 = vmul.f32 %v545, %v756
      %v762 = vsel %vm555, %v760, 0.0
      %v763 = vadd.f32 %v758, %v762
      %v764 = vrot.slane %v763, 4
      %v765 = vadd.f32 %v763, %v764
      %v766 = vrot.slane %v765, 2
      %v767 = vadd.f32 %v765, %v766
      %v768 = vrot.slane %v767, 1
      %v769 = vadd.f32 %v767, %v768
      %v770 = vsel %vm555, %v761, 0.0
      %v771 = vadd.f32 %v759, %v770
      %v772 = vrot.slane %v771, 4
      %v773 = vadd.f32 %v771, %v772
      %v774 = vrot.slane %v773, 2
      %v775 = vadd.f32 %v773, %v774
      %v776 = vrot.slane %v775, 1
      %v777 = vadd.f32 %v775, %v776
      %v778 = vsel %vm555, %v619, %v694
      %v779 = vsel %vm555, %v627, %v702
      %vm780 = vcmask 1041408
      %v781 = vsel %vm780, %v778, %v769
      %v782 = vsel %vm780, %v779, %v777
      %v785 = vrot.slane %v782, 4
      %vm786 = vcmask 1043456
      %v787 = vsel %vm786, %v781, %v785
      %789 = vst [vmem:[%s181] sm:$0x77] %v787
      %s790 = smul.u32 2, %s18
      %p791 = scmp.lt.s32.totalorder %s17, 1
      %s792 = scalar_select %p791, %s17, 1
      %p793 = scmp.lt.s32.totalorder %s790, 1
      %s794 = scalar_select %p793, %s790, 1
      %s795 = smul.addr %s792, 2
      %s796 = sadd.s32 %s794, %s795
      %s797 = smul.addr %s796, 4
      %s798 = scalar_lea.vmem %s2, %s797
      // Predicated region
      $region29: #{trilinear_forward.1} parent=27 // pred_check
        %p799 = pneg %p94
      $region30: #{trilinear_forward.1} parent=27 // pred_check_branch
        %801 = sbr.rel (%p799) target = $region32
      $region31: #{trilinear_forward.1} parent=27 // pred_region
        %s802 = smul.u32 2, %s18
      $region32: #{trilinear_forward.1} parent=27 // pred_fallthru
        _
    $region28: #{trilinear_forward.1} parent=5 // pred_fallthru
      _
    %p803 = scmp.le.s32.totalorder 2, %s8
    // Predicated region
    $region33: #{trilinear_forward.1} parent=5 // pred_check
      %p804 = pneg %p803
    $region34: #{trilinear_forward.1} parent=5 // pred_check_branch
      %806 = sbr.rel (%p804) target = $region36
    $region35: #{trilinear_forward.1} parent=5 // pred_region
      %s807 = ssub.s32 %s8, 2
      // Predicated region
      $region37: #{trilinear_forward.1} parent=35 // pred_check
        %p808 = pneg %p100
      $region38: #{trilinear_forward.1} parent=35 // pred_check_branch
        %810 = sbr.rel (%p808) target = $region40
      $region39: #{trilinear_forward.1} parent=35 // pred_region
        %s811 = smul.u32 2, %s20
        %p812 = scmp.lt.s32.totalorder %s19, 1
        %s813 = scalar_select %p812, %s19, 1
        %p814 = scmp.lt.s32.totalorder %s811, 1
        %s815 = scalar_select %p814, %s811, 1
        %s816 = smul.addr %s813, 2
        %s817 = sadd.s32 %s815, %s816
        %s818 = smul.addr %s817, 4
        %s819 = scalar_lea.vmem %s2, %s818
      $region40: #{trilinear_forward.1} parent=35 // pred_fallthru
        _
    $region36: #{trilinear_forward.1} parent=5 // pred_fallthru
      _
  $region6: #{trilinear_forward.1} parent=0 // loop_footer
    %s12 = sadd.s32 1, %s8
  $region7: #{trilinear_forward.1} parent=0 // loop_footer_branch
    %7 = sbr.rel target = $region3
  $region8: #{trilinear_forward.1} parent=0 // loop_exit
    _

</llo_original>
